<compile_context>
chip_gen: v6e
topology: v6e:2x2x1
jax: 0.10.0
libtpu: 0.0.40
codegen_flags: <defaults>
</compile_context>

<pallas_src>
import jax
import jax.numpy as jnp
from jax.experimental import pallas as pl
from jax.experimental.pallas import tpu as pltpu


# ----------------------------- static shapes -------------------------------

N_BATCH = 2
C_IN, H_IN, W_IN = 4, 16, 16
C_OUT, KH, KW = 8, 3, 3
STRIDE, PAD = 2, 1
OH = OW = 8
S_OUT = OH * OW                          # 64 spatial positions per sample
K_IM2COL = C_IN * KH * KW                # 36 = im2col contraction dim
IN_FEATURES = C_OUT * S_OUT              # 512  (PyTorch NCHW flatten of the conv)
OUT_FEATURES = 64
N_PAD = 128                              # Linear output padded to one lane group


# ------------------------------ Pallas kernel -------------------------------

def fused_forward_kernel(pt_ref, wc_ref, bc_ref, w2_ref, b2_ref, feat_ref, out_ref):
    """Per-sample conv (im2col GEMM) + bias + ReLU + Linear, resident in VMEM.

    pt_ref  : (1, K_IM2COL, S_OUT)   bf16  transposed im2col patches, one sample
    wc_ref  : (C_OUT, K_IM2COL)      bf16  conv weight reshaped (co, ci*kh*kw)
    bc_ref  : (C_OUT, S_OUT)         f32   conv bias, pre-tiled over lanes
    w2_ref  : (C_OUT, S_OUT, N_PAD)  bf16  Linear weight regrouped per conv chan
    b2_ref  : (1, N_PAD)             f32   Linear bias, lane padded
    feat_ref: (1, C_OUT, S_OUT)      f32   == PyTorch NCHW-flatten feat tile
    out_ref : (1, 1, N_PAD)          f32   Linear output (lanes >= 64 are junk)
    """
    # Conv as im2col GEMM; result rows = co, lanes = (oh, ow)  ==> NCHW order.
    h = jnp.dot(wc_ref[...], pt_ref[0], preferred_element_type=jnp.float32)
    h = jnp.maximum(h + bc_ref[...], 0.0)            # (C_OUT, S_OUT) = feat
    feat_ref[0] = h

    # Linear: out[j] = sum_co sum_s feat[co, s] * W_last[j, co*64 + s] + b[j]
    # done as 8 tiny static MXU dots (no reshape / relayout needed).
    hb = h.astype(jnp.bfloat16)
    acc = b2_ref[...]                                 # (1, N_PAD) f32
    for co in range(C_OUT):                           # static unroll
        acc = acc + jnp.dot(hb[co:co + 1, :], w2_ref[co],
                            preferred_element_type=jnp.float32)
    out_ref[0] = acc


# ------------------------- one-time weight re-layout ------------------------

def prepare_params(w_conv, b_conv, w_last, b_last):
    """Re-layout PyTorch parameters into GEMM form (call ONCE, outside jit)."""
    # Conv weight (C_OUT, C_IN, KH, KW) -> (C_OUT, 36), columns (ci, kh, kw).
    wc2d = w_conv.reshape(C_OUT, K_IM2COL).astype(jnp.bfloat16)
    # Conv bias tiled across the spatial lane dim (kept f32).
    bc2d = jnp.broadcast_to(b_conv.astype(jnp.float32)[:, None], (C_OUT, S_OUT))
    bc2d = bc2d + jnp.zeros_like(bc2d)                # materialize
    # Linear weight (64, 512) regrouped so that w2r3[co, s, j] = W[j, co*64+s],
    # lane-padded 64 -> 128 outputs, cast to bf16.
    w2 = w_last.astype(jnp.float32).reshape(OUT_FEATURES, C_OUT, S_OUT)
    w2r3 = jnp.transpose(w2, (1, 2, 0))                           # (8, 64, 64)
    w2r3 = jnp.pad(w2r3, ((0, 0), (0, 0), (0, N_PAD - OUT_FEATURES)))
    w2r3 = w2r3.astype(jnp.bfloat16)                              # (8, 64, 128)
    b2p = jnp.pad(b_last.astype(jnp.float32),
                  (0, N_PAD - OUT_FEATURES)).reshape(1, N_PAD)
    return wc2d, bc2d, w2r3, b2p


# --------------------------------- wrapper ----------------------------------

def wrapper_forward(x_nchw, prep):
    """Equivalent of Wrapper.forward: returns (feat, out). Single fused kernel."""
    wc2d, bc2d, w2r3, b2p = prep
    n = x_nchw.shape[0]

    # Glue (tiny, off the hot path): zero-pad spatially and build transposed
    # im2col patches (n, 36, 64): patches[n, ci*9+ki*3+kj, oh*8+ow]
    #   = x_pad[n, ci, 2*oh + ki, 2*ow + kj].
    x_pad = jnp.pad(x_nchw.astype(jnp.float32),
                    ((0, 0), (0, 0), (PAD, PAD), (PAD, PAD)))
    taps = []
    for ki in range(KH):
        for kj in range(KW):
            taps.append(x_pad[:, :, ki::STRIDE, kj::STRIDE][:, :, :OH, :OW])
    patches = jnp.stack(taps, axis=2)                       # (n, C_IN, 9, OH, OW)
    patches_t = patches.reshape(n, K_IM2COL, S_OUT).astype(jnp.bfloat16)

    feat_p, out_p = pl.pallas_call(
        fused_forward_kernel,
        # Batch grid axis: weights use constant index_maps so they are DMA'd
        # once per call and stay resident across grid steps; "parallel" lets
        # v7x shard samples/micro-batches across its two TensorCores.
        grid=(n,),
        in_specs=[
            pl.BlockSpec((1, K_IM2COL, S_OUT), lambda i: (i, 0, 0)),
            pl.BlockSpec((C_OUT, K_IM2COL), lambda i: (0, 0)),
            pl.BlockSpec((C_OUT, S_OUT), lambda i: (0, 0)),
            pl.BlockSpec((C_OUT, S_OUT, N_PAD), lambda i: (0, 0, 0)),
            pl.BlockSpec((1, N_PAD), lambda i: (0, 0)),
        ],
        out_specs=(
            pl.BlockSpec((1, C_OUT, S_OUT), lambda i: (i, 0, 0)),
            pl.BlockSpec((1, 1, N_PAD), lambda i: (i, 0, 0)),
        ),
        out_shape=(
            jax.ShapeDtypeStruct((n, C_OUT, S_OUT), jnp.float32),
            jax.ShapeDtypeStruct((n, 1, N_PAD), jnp.float32),
        ),
        compiler_params=pltpu.CompilerParams(dimension_semantics=("parallel",)),
    )(patches_t, wc2d, bc2d, w2r3, b2p)

    # Cheap XLA glue: (n, 8, 64) is already NCHW order -> contiguous reshape;
    # strip the Linear lane padding.
    feat = feat_p.reshape(n, IN_FEATURES)
    out = out_p.reshape(n, N_PAD)[:, :OUT_FEATURES]
    return feat, out


# ------------------------------- reference ----------------------------------

def reference_forward(x_nchw, params):
    w_conv, b_conv, w_last, b_last = params
    y = jax.lax.conv_general_dilated(
        x_nchw, w_conv, window_strides=(STRIDE, STRIDE),
        padding=((PAD, PAD), (PAD, PAD)),
        dimension_numbers=("NCHW", "OIHW", "NCHW"))
    y = jnp.maximum(y + b_conv[None, :, None, None], 0.0)
    feat = y.reshape(x_nchw.shape[0], -1)
    out = feat @ w_last.T + b_last
    return feat, out


# --------------------------------- main --------------------------------------

if __name__ == "__main__":
    key = jax.random.PRNGKey(0)
    k_x, k_wc, k_bc, k_wl, k_bl = jax.random.split(key, 5)

    x = jax.random.normal(k_x, (N_BATCH, C_IN, H_IN, W_IN), dtype=jnp.float32)

    # Deterministic parameter init (PyTorch layouts: OIHW conv, [out,in] linear).
    w_conv = 0.1 * jax.random.normal(k_wc, (C_OUT, C_IN, KH, KW), dtype=jnp.float32)
    b_conv = 0.1 * jax.random.normal(k_bc, (C_OUT,), dtype=jnp.float32)
    w_last = 0.05 * jax.random.normal(k_wl, (OUT_FEATURES, IN_FEATURES), dtype=jnp.float32)
    b_last = 0.05 * jax.random.normal(k_bl, (OUT_FEATURES,), dtype=jnp.float32)
    params = (w_conv, b_conv, w_last, b_last)

    # One-time GEMM-layout preparation (outside the jitted forward).
    prep = prepare_params(*params)
    prep = jax.tree_util.tree_map(jax.block_until_ready, prep)

    fwd = jax.jit(wrapper_forward)
    feat, out = fwd(x, prep)
    jax.block_until_ready((feat, out))

    feat_ref, out_ref = reference_forward(x, params)
    assert feat.shape == (N_BATCH, IN_FEATURES) and out.shape == (N_BATCH, OUT_FEATURES)
    # bf16 GEMM operands (f32 accumulation) -> slightly looser tolerances.
    assert jnp.allclose(feat, feat_ref, atol=2e-2, rtol=2e-2)
    assert jnp.allclose(out, out_ref, atol=2e-2, rtol=2e-2)

    print("KERNEL_OK")
</pallas_src>

<mosaic_0001>
module attributes {stable_mosaic.version = 11 : i64} {
  func.func @fused_forward_kernel(%arg0: i32, %arg1: memref<1x36x64xbf16, #tpu.memory_space<vmem>>, %arg2: memref<8x36xbf16, #tpu.memory_space<vmem>>, %arg3: memref<8x64xf32, #tpu.memory_space<vmem>>, %arg4: memref<8x64x128xbf16, #tpu.memory_space<vmem>>, %arg5: memref<1x128xf32, #tpu.memory_space<vmem>>, %arg6: memref<1x8x64xf32, #tpu.memory_space<vmem>>, %arg7: memref<1x1x128xf32, #tpu.memory_space<vmem>>) attributes {dimension_semantics = [#tpu.dimension_semantics<parallel>], iteration_bounds = array<i64: 2>, scalar_prefetch = 0 : i64, scratch_operands = 0 : i64, tpu.core_type = #tpu.core_type<tc>, window_params = [{transform_indices = @transform_0, window_bounds = array<i64: 1, 36, 64>}, {pipeline_mode = #tpu.pipeline_mode<synchronous>, transform_indices = @transform_1, window_bounds = array<i64: 8, 36>}, {pipeline_mode = #tpu.pipeline_mode<synchronous>, transform_indices = @transform_2, window_bounds = array<i64: 8, 64>}, {pipeline_mode = #tpu.pipeline_mode<synchronous>, transform_indices = @transform_3, window_bounds = array<i64: 8, 64, 128>}, {pipeline_mode = #tpu.pipeline_mode<synchronous>, transform_indices = @transform_4, window_bounds = array<i64: 1, 128>}, {transform_indices = @transform_5, window_bounds = array<i64: 1, 8, 64>}, {transform_indices = @transform_6, window_bounds = array<i64: 1, 1, 128>}]} {
    %c0 = arith.constant 0 : index
    %c0_0 = arith.constant 0 : index
    %0 = vector.load %arg2[%c0, %c0_0] : memref<8x36xbf16, #tpu.memory_space<vmem>>, vector<8x36xbf16>
    %c0_1 = arith.constant 0 : index
    %c0_2 = arith.constant 0 : index
    %c0_3 = arith.constant 0 : index
    %1 = vector.load %arg1[%c0_1, %c0_2, %c0_3] : memref<1x36x64xbf16, #tpu.memory_space<vmem>>, vector<1x36x64xbf16>
    %2 = vector.shape_cast %1 : vector<1x36x64xbf16> to vector<36x64xbf16>
    %cst = arith.constant dense<0.000000e+00> : vector<8x64xf32>
    %3 = tpu.matmul %0, %2, %cst {dimension_numbers = #tpu.dot_dimension_numbers<[1], [0], [0], [1], [0, 0, 1, 1], [], []>} : vector<8x36xbf16>, vector<36x64xbf16>, vector<8x64xf32> -> vector<8x64xf32>
    %c0_4 = arith.constant 0 : index
    %c0_5 = arith.constant 0 : index
    %4 = vector.load %arg3[%c0_4, %c0_5] : memref<8x64xf32, #tpu.memory_space<vmem>>, vector<8x64xf32>
    %5 = arith.addf %3, %4 : vector<8x64xf32>
    %cst_6 = arith.constant 0.000000e+00 : f32
    %6 = vector.broadcast %cst_6 : f32 to vector<8x64xf32>
    %7 = arith.maximumf %5, %6 : vector<8x64xf32>
    %c0_7 = arith.constant 0 : index
    %c0_8 = arith.constant 0 : index
    %c0_9 = arith.constant 0 : index
    %8 = vector.load %arg6[%c0_7, %c0_8, %c0_9] : memref<1x8x64xf32, #tpu.memory_space<vmem>>, vector<1x8x64xf32>
    %9 = vector.shape_cast %8 : vector<1x8x64xf32> to vector<8x64xf32>
    %10 = vector.shape_cast %7 : vector<8x64xf32> to vector<1x8x64xf32>
    tpu.vector_store %arg6[%c0_7, %c0_8, %c0_9], %10 {strides = array<i32>} : memref<1x8x64xf32, #tpu.memory_space<vmem>>, vector<1x8x64xf32>,
    %11 = arith.truncf %7 : vector<8x64xf32> to vector<8x64xbf16>
    %c0_10 = arith.constant 0 : index
    %c0_11 = arith.constant 0 : index
    %12 = vector.load %arg5[%c0_10, %c0_11] : memref<1x128xf32, #tpu.memory_space<vmem>>, vector<1x128xf32>
    %13 = vector.extract_strided_slice %11 {offsets = [0, 0], sizes = [1, 64], strides = [1, 1]} : vector<8x64xbf16> to vector<1x64xbf16>
    %c0_12 = arith.constant 0 : index
    %c0_13 = arith.constant 0 : index
    %c0_14 = arith.constant 0 : index
    %14 = vector.load %arg4[%c0_12, %c0_13, %c0_14] : memref<8x64x128xbf16, #tpu.memory_space<vmem>>, vector<1x64x128xbf16>
    %15 = vector.shape_cast %14 : vector<1x64x128xbf16> to vector<64x128xbf16>
    %cst_15 = arith.constant dense<0.000000e+00> : vector<1x128xf32>
    %16 = tpu.matmul %13, %15, %cst_15 {dimension_numbers = #tpu.dot_dimension_numbers<[1], [0], [0], [1], [0, 0, 1, 1], [], []>} : vector<1x64xbf16>, vector<64x128xbf16>, vector<1x128xf32> -> vector<1x128xf32>
    %17 = arith.addf %12, %16 : vector<1x128xf32>
    %18 = vector.extract_strided_slice %11 {offsets = [1, 0], sizes = [1, 64], strides = [1, 1]} : vector<8x64xbf16> to vector<1x64xbf16>
    %c1 = arith.constant 1 : index
    %c0_16 = arith.constant 0 : index
    %c0_17 = arith.constant 0 : index
    %19 = vector.load %arg4[%c1, %c0_16, %c0_17] : memref<8x64x128xbf16, #tpu.memory_space<vmem>>, vector<1x64x128xbf16>
    %20 = vector.shape_cast %19 : vector<1x64x128xbf16> to vector<64x128xbf16>
    %cst_18 = arith.constant dense<0.000000e+00> : vector<1x128xf32>
    %21 = tpu.matmul %18, %20, %cst_18 {dimension_numbers = #tpu.dot_dimension_numbers<[1], [0], [0], [1], [0, 0, 1, 1], [], []>} : vector<1x64xbf16>, vector<64x128xbf16>, vector<1x128xf32> -> vector<1x128xf32>
    %22 = arith.addf %17, %21 : vector<1x128xf32>
    %23 = vector.extract_strided_slice %11 {offsets = [2, 0], sizes = [1, 64], strides = [1, 1]} : vector<8x64xbf16> to vector<1x64xbf16>
    %c2 = arith.constant 2 : index
    %c0_19 = arith.constant 0 : index
    %c0_20 = arith.constant 0 : index
    %24 = vector.load %arg4[%c2, %c0_19, %c0_20] : memref<8x64x128xbf16, #tpu.memory_space<vmem>>, vector<1x64x128xbf16>
    %25 = vector.shape_cast %24 : vector<1x64x128xbf16> to vector<64x128xbf16>
    %cst_21 = arith.constant dense<0.000000e+00> : vector<1x128xf32>
    %26 = tpu.matmul %23, %25, %cst_21 {dimension_numbers = #tpu.dot_dimension_numbers<[1], [0], [0], [1], [0, 0, 1, 1], [], []>} : vector<1x64xbf16>, vector<64x128xbf16>, vector<1x128xf32> -> vector<1x128xf32>
    %27 = arith.addf %22, %26 : vector<1x128xf32>
    %28 = vector.extract_strided_slice %11 {offsets = [3, 0], sizes = [1, 64], strides = [1, 1]} : vector<8x64xbf16> to vector<1x64xbf16>
    %c3 = arith.constant 3 : index
    %c0_22 = arith.constant 0 : index
    %c0_23 = arith.constant 0 : index
    %29 = vector.load %arg4[%c3, %c0_22, %c0_23] : memref<8x64x128xbf16, #tpu.memory_space<vmem>>, vector<1x64x128xbf16>
    %30 = vector.shape_cast %29 : vector<1x64x128xbf16> to vector<64x128xbf16>
    %cst_24 = arith.constant dense<0.000000e+00> : vector<1x128xf32>
    %31 = tpu.matmul %28, %30, %cst_24 {dimension_numbers = #tpu.dot_dimension_numbers<[1], [0], [0], [1], [0, 0, 1, 1], [], []>} : vector<1x64xbf16>, vector<64x128xbf16>, vector<1x128xf32> -> vector<1x128xf32>
    %32 = arith.addf %27, %31 : vector<1x128xf32>
    %33 = vector.extract_strided_slice %11 {offsets = [4, 0], sizes = [1, 64], strides = [1, 1]} : vector<8x64xbf16> to vector<1x64xbf16>
    %c4 = arith.constant 4 : index
    %c0_25 = arith.constant 0 : index
    %c0_26 = arith.constant 0 : index
    %34 = vector.load %arg4[%c4, %c0_25, %c0_26] : memref<8x64x128xbf16, #tpu.memory_space<vmem>>, vector<1x64x128xbf16>
    %35 = vector.shape_cast %34 : vector<1x64x128xbf16> to vector<64x128xbf16>
    %cst_27 = arith.constant dense<0.000000e+00> : vector<1x128xf32>
    %36 = tpu.matmul %33, %35, %cst_27 {dimension_numbers = #tpu.dot_dimension_numbers<[1], [0], [0], [1], [0, 0, 1, 1], [], []>} : vector<1x64xbf16>, vector<64x128xbf16>, vector<1x128xf32> -> vector<1x128xf32>
    %37 = arith.addf %32, %36 : vector<1x128xf32>
    %38 = vector.extract_strided_slice %11 {offsets = [5, 0], sizes = [1, 64], strides = [1, 1]} : vector<8x64xbf16> to vector<1x64xbf16>
    %c5 = arith.constant 5 : index
    %c0_28 = arith.constant 0 : index
    %c0_29 = arith.constant 0 : index
    %39 = vector.load %arg4[%c5, %c0_28, %c0_29] : memref<8x64x128xbf16, #tpu.memory_space<vmem>>, vector<1x64x128xbf16>
    %40 = vector.shape_cast %39 : vector<1x64x128xbf16> to vector<64x128xbf16>
    %cst_30 = arith.constant dense<0.000000e+00> : vector<1x128xf32>
    %41 = tpu.matmul %38, %40, %cst_30 {dimension_numbers = #tpu.dot_dimension_numbers<[1], [0], [0], [1], [0, 0, 1, 1], [], []>} : vector<1x64xbf16>, vector<64x128xbf16>, vector<1x128xf32> -> vector<1x128xf32>
    %42 = arith.addf %37, %41 : vector<1x128xf32>
    %43 = vector.extract_strided_slice %11 {offsets = [6, 0], sizes = [1, 64], strides = [1, 1]} : vector<8x64xbf16> to vector<1x64xbf16>
    %c6 = arith.constant 6 : index
    %c0_31 = arith.constant 0 : index
    %c0_32 = arith.constant 0 : index
    %44 = vector.load %arg4[%c6, %c0_31, %c0_32] : memref<8x64x128xbf16, #tpu.memory_space<vmem>>, vector<1x64x128xbf16>
    %45 = vector.shape_cast %44 : vector<1x64x128xbf16> to vector<64x128xbf16>
    %cst_33 = arith.constant dense<0.000000e+00> : vector<1x128xf32>
    %46 = tpu.matmul %43, %45, %cst_33 {dimension_numbers = #tpu.dot_dimension_numbers<[1], [0], [0], [1], [0, 0, 1, 1], [], []>} : vector<1x64xbf16>, vector<64x128xbf16>, vector<1x128xf32> -> vector<1x128xf32>
    %47 = arith.addf %42, %46 : vector<1x128xf32>
    %48 = vector.extract_strided_slice %11 {offsets = [7, 0], sizes = [1, 64], strides = [1, 1]} : vector<8x64xbf16> to vector<1x64xbf16>
    %c7 = arith.constant 7 : index
    %c0_34 = arith.constant 0 : index
    %c0_35 = arith.constant 0 : index
    %49 = vector.load %arg4[%c7, %c0_34, %c0_35] : memref<8x64x128xbf16, #tpu.memory_space<vmem>>, vector<1x64x128xbf16>
    %50 = vector.shape_cast %49 : vector<1x64x128xbf16> to vector<64x128xbf16>
    %cst_36 = arith.constant dense<0.000000e+00> : vector<1x128xf32>
    %51 = tpu.matmul %48, %50, %cst_36 {dimension_numbers = #tpu.dot_dimension_numbers<[1], [0], [0], [1], [0, 0, 1, 1], [], []>} : vector<1x64xbf16>, vector<64x128xbf16>, vector<1x128xf32> -> vector<1x128xf32>
    %52 = arith.addf %47, %51 : vector<1x128xf32>
    %c0_37 = arith.constant 0 : index
    %c0_38 = arith.constant 0 : index
    %c0_39 = arith.constant 0 : index
    %53 = vector.load %arg7[%c0_37, %c0_38, %c0_39] : memref<1x1x128xf32, #tpu.memory_space<vmem>>, vector<1x1x128xf32>
    %54 = vector.shape_cast %53 : vector<1x1x128xf32> to vector<1x128xf32>
    %55 = vector.shape_cast %52 : vector<1x128xf32> to vector<1x1x128xf32>
    tpu.vector_store %arg7[%c0_37, %c0_38, %c0_39], %55 {strides = array<i32>} : memref<1x1x128xf32, #tpu.memory_space<vmem>>, vector<1x1x128xf32>,
    return
  }
  func.func @transform_0(%arg0: i32) -> (i32, i32, i32) {
    %c0_i32 = arith.constant 0 : i32
    %c0_i32_0 = arith.constant 0 : i32
    %c0_i32_1 = arith.constant 0 : i32
    return %arg0, %c0_i32, %c0_i32_0 : i32, i32, i32
  }
  func.func @transform_1(%arg0: i32) -> (i32, i32) {
    %c0_i32 = arith.constant 0 : i32
    %c0_i32_0 = arith.constant 0 : i32
    %c0_i32_1 = arith.constant 0 : i32
    return %c0_i32, %c0_i32_0 : i32, i32
  }
  func.func @transform_2(%arg0: i32) -> (i32, i32) {
    %c0_i32 = arith.constant 0 : i32
    %c0_i32_0 = arith.constant 0 : i32
    %c0_i32_1 = arith.constant 0 : i32
    return %c0_i32, %c0_i32_0 : i32, i32
  }
  func.func @transform_3(%arg0: i32) -> (i32, i32, i32) {
    %c0_i32 = arith.constant 0 : i32
    %c0_i32_0 = arith.constant 0 : i32
    %c0_i32_1 = arith.constant 0 : i32
    %c0_i32_2 = arith.constant 0 : i32
    return %c0_i32, %c0_i32_0, %c0_i32_1 : i32, i32, i32
  }
  func.func @transform_4(%arg0: i32) -> (i32, i32) {
    %c0_i32 = arith.constant 0 : i32
    %c0_i32_0 = arith.constant 0 : i32
    %c0_i32_1 = arith.constant 0 : i32
    return %c0_i32, %c0_i32_0 : i32, i32
  }
  func.func @transform_5(%arg0: i32) -> (i32, i32, i32) {
    %c0_i32 = arith.constant 0 : i32
    %c0_i32_0 = arith.constant 0 : i32
    %c0_i32_1 = arith.constant 0 : i32
    return %arg0, %c0_i32, %c0_i32_0 : i32, i32, i32
  }
  func.func @transform_6(%arg0: i32) -> (i32, i32, i32) {
    %c0_i32 = arith.constant 0 : i32
    %c0_i32_0 = arith.constant 0 : i32
    %c0_i32_1 = arith.constant 0 : i32
    return %arg0, %c0_i32, %c0_i32_0 : i32, i32, i32
  }
}

</mosaic_0001>

<llo_original>
// kernel: wrapper_forward.1
$region0: #{wrapper_forward.1}
  #allocation0 [shape = 'u32[]', space=smem, size = 0x4, offset = 0x4, fixed_abs, tag = 'smem constant byte address 0x4 - core index']
  #allocation1 [shape = 'u32[144,128]{1,0:T(1,128)}', space=vmem, size = 0x12000, scoped, tag = 'internal scratch']
  %s0 = inlined_call_operand.vmem [shape: bf16[2,36,64], index: 0, kind: input, shape index: {}]
  %s1 = inlined_call_operand.vmem [shape: bf16[8,36], index: 1, kind: input, shape index: {}]
  %s2 = inlined_call_operand.vmem [shape: f32[8,64], index: 2, kind: input, shape index: {}]
  %s3 = inlined_call_operand.vmem [shape: bf16[8,64,128], index: 3, kind: input, shape index: {}]
  %s4 = inlined_call_operand.vmem [shape: f32[1,128], index: 4, kind: input, shape index: {}]
  %s5 = inlined_call_operand.vmem [shape: f32[2,8,64], index: 5, kind: output, shape index: {0}]
  %s6 = inlined_call_operand.hbm [shape: f32[2,1,128], index: 6, kind: output, shape index: {1}]
  %7 = xla_tuple %s5, %s6
  %s8 = sld [smem:[#allocation0]]
  $region61: #{wrapper_forward.1} parent=0
    _
  %s10 = ssub.s32 1, %s8
  %s11 = scalar_select 0, %s10, %s8
  $region1: #{wrapper_forward.1} parent=0
    #allocation2 [shape = 'u8[1024]{0}', space=vmem, size = 0x400, scoped, tag = 'output window, operand 1']
    #allocation3 [shape = 's32[2]{0}', space=sflag, size = 0x8, scoped, tag = 'scoped memory for wrapper_forward.1']
    %12 = vsyncpa [#allocation3], 0
    %s13 = scalar_lea.sflag [#allocation3], 1
    %14 = vsyncpa %s13, 0
    loop: start=0, step=1, limit=4
    $region2: #{wrapper_forward.1} parent=1 // loop_pre_header
      _
    $region3: #{wrapper_forward.1} parent=1 // loop_header
      %s16 = sphi 0, %s20
      %p17 = scmp.ge.s32.totalorder %s16, 4
      %s26 = sphi 0, %s28
      %s29 = sphi 0, %s26
      %s30 = sphi 0, %s29
      %s46 = sphi 0, %s30
      %s50 = sphi 0, %s50
      %s52 = sphi 0, %s50
      %s53 = sphi 0, %s52
      %s67 = sphi 0, %s53
      %s71 = sphi 0, %s71
      %s73 = sphi 0, %s71
      %s74 = sphi 0, %s73
      %s88 = sphi 0, %s74
      %s92 = sphi 0, %s92
      %s94 = sphi 0, %s92
      %s95 = sphi 0, %s94
      %s109 = sphi 0, %s95
      %s113 = sphi 0, %s113
      %s115 = sphi 0, %s113
      %s116 = sphi 0, %s115
      %s130 = sphi 0, %s116
      %s136 = sphi 0, %s138
      %s139 = sphi 0, %s136
      %s140 = sphi 0, %s139
      %s156 = sphi 0, %s140
      %s162 = sphi 0, %s164
      %s165 = sphi 0, %s162
      %s166 = sphi 0, %s165
      %s182 = sphi 0, %s166
    $region4: #{wrapper_forward.1} parent=1 // loop_header_branch
      %19 = sbr.rel (%p17) target = $region8
    $region5: #{wrapper_forward.1} parent=1 // loop_body
      %s21 = ssub.s32 %s16, 1
      %s22 = ssub.s32 %s16, 2
      %s23 = sadd.s32 %s16, 1
      %s24 = ssub.s32 %s16, %s23
      %p25 = scmp.eq.s32.totalorder %s24, 0
      %s27 = sadd.s32 %s26, 1
      %s28 = scalar_select %p25, %s26, %s27
      %p31 = pneg %p25
      %p32 = scmp.eq.s32.totalorder %s16, 1
      %p33 = por %p31, %p32
      %p34 = scmp.ne.s32.totalorder %s26, %s29
      %p35 = scmp.eq.s32.totalorder %s16, 0
      %p36 = por %p34, %p35
      %p37 = scmp.ne.s32.totalorder %s26, %s29
      %p38 = scmp.eq.s32.totalorder %s21, 1
      %p39 = por %p37, %p38
      %p40 = scmp.ne.s32.totalorder %s29, %s30
      %p41 = scmp.eq.s32.totalorder %s21, 0
      %p42 = por %p40, %p41
      %p43 = scmp.ne.s32.totalorder %s29, %s30
      %p44 = scmp.eq.s32.totalorder %s22, 1
      %p45 = por %p43, %p44
      %p47 = scmp.ne.s32.totalorder %s30, %s46
      %p48 = scmp.eq.s32.totalorder %s22, 0
      %p49 = por %p47, %p48
      %s51 = sadd.s32 %s50, 1
      %p54 = scmp.eq.s32.totalorder %s16, 1
      %p55 = scmp.ne.s32.totalorder %s50, %s52
      %p56 = scmp.eq.s32.totalorder %s16, 0
      %p57 = por %p55, %p56
      %p58 = scmp.ne.s32.totalorder %s50, %s52
      %p59 = scmp.eq.s32.totalorder %s21, 1
      %p60 = por %p58, %p59
      %p61 = scmp.ne.s32.totalorder %s52, %s53
      %p62 = scmp.eq.s32.totalorder %s21, 0
      %p63 = por %p61, %p62
      %p64 = scmp.ne.s32.totalorder %s52, %s53
      %p65 = scmp.eq.s32.totalorder %s22, 1
      %p66 = por %p64, %p65
      %p68 = scmp.ne.s32.totalorder %s53, %s67
      %p69 = scmp.eq.s32.totalorder %s22, 0
      %p70 = por %p68, %p69
      %s72 = sadd.s32 %s71, 1
      %p75 = scmp.eq.s32.totalorder %s16, 1
      %p76 = scmp.ne.s32.totalorder %s71, %s73
      %p77 = scmp.eq.s32.totalorder %s16, 0
      %p78 = por %p76, %p77
      %p79 = scmp.ne.s32.totalorder %s71, %s73
      %p80 = scmp.eq.s32.totalorder %s21, 1
      %p81 = por %p79, %p80
      %p82 = scmp.ne.s32.totalorder %s73, %s74
      %p83 = scmp.eq.s32.totalorder %s21, 0
      %p84 = por %p82, %p83
      %p85 = scmp.ne.s32.totalorder %s73, %s74
      %p86 = scmp.eq.s32.totalorder %s22, 1
      %p87 = por %p85, %p86
      %p89 = scmp.ne.s32.totalorder %s74, %s88
      %p90 = scmp.eq.s32.totalorder %s22, 0
      %p91 = por %p89, %p90
      %s93 = sadd.s32 %s92, 1
      %p96 = scmp.eq.s32.totalorder %s16, 1
      %p97 = scmp.ne.s32.totalorder %s92, %s94
      %p98 = scmp.eq.s32.totalorder %s16, 0
      %p99 = por %p97, %p98
      %p100 = scmp.ne.s32.totalorder %s92, %s94
      %p101 = scmp.eq.s32.totalorder %s21, 1
      %p102 = por %p100, %p101
      %p103 = scmp.ne.s32.totalorder %s94, %s95
      %p104 = scmp.eq.s32.totalorder %s21, 0
      %p105 = por %p103, %p104
      %p106 = scmp.ne.s32.totalorder %s94, %s95
      %p107 = scmp.eq.s32.totalorder %s22, 1
      %p108 = por %p106, %p107
      %p110 = scmp.ne.s32.totalorder %s95, %s109
      %p111 = scmp.eq.s32.totalorder %s22, 0
      %p112 = por %p110, %p111
      %s114 = sadd.s32 %s113, 1
      %p117 = scmp.eq.s32.totalorder %s16, 1
      %p118 = scmp.ne.s32.totalorder %s113, %s115
      %p119 = scmp.eq.s32.totalorder %s16, 0
      %p120 = por %p118, %p119
      %p121 = scmp.ne.s32.totalorder %s113, %s115
      %p122 = scmp.eq.s32.totalorder %s21, 1
      %p123 = por %p121, %p122
      %p124 = scmp.ne.s32.totalorder %s115, %s116
      %p125 = scmp.eq.s32.totalorder %s21, 0
      %p126 = por %p124, %p125
      %p127 = scmp.ne.s32.totalorder %s115, %s116
      %p128 = scmp.eq.s32.totalorder %s22, 1
      %p129 = por %p127, %p128
      %p131 = scmp.ne.s32.totalorder %s116, %s130
      %p132 = scmp.eq.s32.totalorder %s22, 0
      %p133 = por %p131, %p132
      %s134 = ssub.s32 %s16, %s23
      %p135 = scmp.eq.s32.totalorder %s134, 0
      %s137 = sadd.s32 %s136, 1
      %s138 = scalar_select %p135, %s136, %s137
      %p141 = pneg %p135
      %p142 = scmp.eq.s32.totalorder %s16, 1
      %p143 = por %p141, %p142
      %p144 = scmp.ne.s32.totalorder %s136, %s139
      %p145 = scmp.eq.s32.totalorder %s16, 0
      %p146 = por %p144, %p145
      %p147 = scmp.ne.s32.totalorder %s136, %s139
      %p148 = scmp.eq.s32.totalorder %s21, 1
      %p149 = por %p147, %p148
      %p150 = scmp.ne.s32.totalorder %s139, %s140
      %p151 = scmp.eq.s32.totalorder %s21, 0
      %p152 = por %p150, %p151
      %p153 = scmp.ne.s32.totalorder %s139, %s140
      %p154 = scmp.eq.s32.totalorder %s22, 1
      %p155 = por %p153, %p154
      %p157 = scmp.ne.s32.totalorder %s140, %s156
      %p158 = scmp.eq.s32.totalorder %s22, 0
      %p159 = por %p157, %p158
      %s160 = ssub.s32 %s16, %s23
      %p161 = scmp.eq.s32.totalorder %s160, 0
      %s163 = sadd.s32 %s162, 1
      %s164 = scalar_select %p161, %s162, %s163
      %p167 = pneg %p161
      %p168 = scmp.eq.s32.totalorder %s16, 1
      %p169 = por %p167, %p168
      %p170 = scmp.ne.s32.totalorder %s162, %s165
      %p171 = scmp.eq.s32.totalorder %s16, 0
      %p172 = por %p170, %p171
      %p173 = scmp.ne.s32.totalorder %s162, %s165
      %p174 = scmp.eq.s32.totalorder %s21, 1
      %p175 = por %p173, %p174
      %p176 = scmp.ne.s32.totalorder %s165, %s166
      %p177 = scmp.eq.s32.totalorder %s21, 0
      %p178 = por %p176, %p177
      %p179 = scmp.ne.s32.totalorder %s165, %s166
      %p180 = scmp.eq.s32.totalorder %s22, 1
      %p181 = por %p179, %p180
      %p183 = scmp.ne.s32.totalorder %s166, %s182
      %p184 = scmp.eq.s32.totalorder %s22, 0
      %p185 = por %p183, %p184
      %p186 = scmp.le.s32.totalorder 1, %s16
      %p187 = scmp.lt.s32.totalorder %s16, 3
      %p188 = pnand %p186, %p187
      %p189 = pneg %p188
      // Predicated region
      $region9: #{wrapper_forward.1} parent=5 // pred_check
        _
      $region10: #{wrapper_forward.1} parent=5 // pred_check_branch
        %191 = sbr.rel (%p188) target = $region12
      $region11: #{wrapper_forward.1} parent=5 // pred_region
        %s192 = ssub.s32 %s16, 1
        // Predicated region
        $region13: #{wrapper_forward.1} parent=11 // pred_check
          %p193 = pneg %p63
        $region14: #{wrapper_forward.1} parent=11 // pred_check_branch
          %195 = sbr.rel (%p193) target = $region16
        $region15: #{wrapper_forward.1} parent=11 // pred_region
          _
        $region16: #{wrapper_forward.1} parent=11 // pred_fallthru
          _
        // Predicated region
        $region17: #{wrapper_forward.1} parent=11 // pred_check
          %p196 = pneg %p84
        $region18: #{wrapper_forward.1} parent=11 // pred_check_branch
          %198 = sbr.rel (%p196) target = $region20
        $region19: #{wrapper_forward.1} parent=11 // pred_region
          _
        $region20: #{wrapper_forward.1} parent=11 // pred_fallthru
          _
        // Predicated region
        $region21: #{wrapper_forward.1} parent=11 // pred_check
          %p199 = pneg %p105
        $region22: #{wrapper_forward.1} parent=11 // pred_check_branch
          %201 = sbr.rel (%p199) target = $region24
        $region23: #{wrapper_forward.1} parent=11 // pred_region
          _
        $region24: #{wrapper_forward.1} parent=11 // pred_fallthru
          _
        // Predicated region
        $region25: #{wrapper_forward.1} parent=11 // pred_check
          %p202 = pneg %p126
        $region26: #{wrapper_forward.1} parent=11 // pred_check_branch
          %204 = sbr.rel (%p202) target = $region28
        $region27: #{wrapper_forward.1} parent=11 // pred_region
          _
        $region28: #{wrapper_forward.1} parent=11 // pred_fallthru
          _
      $region12: #{wrapper_forward.1} parent=5 // pred_fallthru
        _
      %p205 = scmp.lt.s32.totalorder %s16, 2
      // Predicated region
      $region29: #{wrapper_forward.1} parent=5 // pred_check
        %p206 = pneg %p205
      $region30: #{wrapper_forward.1} parent=5 // pred_check_branch
        %208 = sbr.rel (%p206) target = $region32
      $region31: #{wrapper_forward.1} parent=5 // pred_region
        // Predicated region
        $region33: #{wrapper_forward.1} parent=31 // pred_check
          %p209 = pneg %p36
        $region34: #{wrapper_forward.1} parent=31 // pred_check_branch
          %211 = sbr.rel (%p209) target = $region36
        $region35: #{wrapper_forward.1} parent=31 // pred_region
          %p212 = scmp.lt.s32.totalorder %s16, 1
          %s213 = scalar_select %p212, %s16, 1
          %s214 = smul.addr %s213, 5
          %s215 = smul.addr %s214, 4
          %s216 = scalar_lea.vmem %s0, %s215
        $region36: #{wrapper_forward.1} parent=31 // pred_fallthru
          _
      $region32: #{wrapper_forward.1} parent=5 // pred_fallthru
        _
      %p217 = scmp.le.s32.totalorder 1, %s16
      %p218 = scmp.lt.s32.totalorder %s16, 3
      %p219 = pnand %p217, %p218
      %p220 = pneg %p219
      // Predicated region
      $region37: #{wrapper_forward.1} parent=5 // pred_check
        _
      $region38: #{wrapper_forward.1} parent=5 // pred_check_branch
        %222 = sbr.rel (%p219) target = $region40
      $region39: #{wrapper_forward.1} parent=5 // pred_region
        %s223 = ssub.s32 %s16, 1
        %p224 = scmp.lt.s32.totalorder %s21, 1
        %s225 = scalar_select %p224, %s21, 1
        %s226 = smul.addr %s225, 5
        %s227 = smul.addr %s226, 4
        %s228 = scalar_lea.vmem %s0, %s227
        %p229 = pneg %p42
        %p230 = pneg %p39
        %p231 = pneg %p63
        %p232 = pneg %p60
        %p233 = pneg %p84
        %p234 = pneg %p81
        %p235 = pneg %p105
        %p236 = pneg %p102
        %p237 = pneg %p126
        %p238 = pneg %p123
        %p239 = pneg %p152
        %p240 = pneg %p149
        %p241 = scmp.lt.s32.totalorder %s21, 1
        %s242 = scalar_select %p241, %s21, 1
        %s243 = smul.addr %s242, 8
        %s244 = scalar_lea.vmem %s5, %s243
        %p245 = pneg %p178
        %p246 = pneg %p175
        %s247 = sand.u32 %s165, 1
        %s248 = scalar_lea.sflag [#allocation3], %s247
        %s249 = sand.u32 %s165, 1
        %s250 = scalar_lea.vmem [#allocation2], %s249
        %p251 = scmp.lt.s32.totalorder %s21, 1
        %s252 = scalar_select %p251, %s21, 1
        %s253 = smul.addr %s252, 5
        %s254 = smul.addr %s253, 4
        %s255 = scalar_lea.vmem %s0, %s254
        %p256 = scmp.lt.s32.totalorder %s21, 1
        %s257 = scalar_select %p256, %s21, 1
        %s258 = smul.addr %s257, 8
        %s259 = scalar_lea.vmem %s5, %s258
        %v261 = vld [vmem:[%s1] sm:$0xf]
        %v262 = vld [vmem:[%s255] sm:$0xf]
        %v263 = vld [vmem:[%s255 + $0x4] sm:$0xf]
        %v264 = vld [vmem:[%s255 + $0x8] sm:$0xf]
        %v265 = vld [vmem:[%s255 + $0xc] sm:$0xf]
        %v266 = vld [vmem:[%s255 + $0x10] sm:$0x3]
        %v267 = vld [vmem:[%s2] sm:$0xff]
        %v273 = vunpack.c.l.b16 %v262
        %v274 = vunpack.c.l.b16 %v263
        %v275 = vunpack.c.l.b16 %v264
        %v276 = vunpack.c.l.b16 %v265
        %v277 = vunpack.c.l.b16 %v266
        %v278 = vpack.c.b16 %v274, %v273
        %v279 = vpack.c.b16 %v276, %v275
        %v280 = vpack.c.b16 %v277, %v277
        %vm283 = vcmask 293888
        %v285 = vsel %vm283, %v261, 0
        %vm287 = vcmask 1041408
        %v289 = vsel %vm287, %v280, 0
        %291 = vmatprep.subr.bf16.mxu0 0
        %292 = vmatpush1.bf16.msra.mxu0 0
        %293 = vmatprep.subr.bf16.mxu0 0
        %294 = vmatpush1.bf16.msra.mxu0 0
        %295 = vmatprep.subr.bf16.mxu0 0
        %296 = vmatpush1.bf16.msra.mxu0 0
        %297 = vmatprep.subr.bf16.mxu0 0
        %298 = vmatpush1.bf16.msra.mxu0 0
        %299 = vmatprep.subr.bf16.mxu0 0
        %300 = vmatpush1.bf16.msra.mxu0 0
        %301 = vmatprep.subr.bf16.mxu0 0
        %302 = vmatpush1.bf16.msra.mxu0 %v289
        %303 = vmatprep.subr.bf16.mxu0 0
        %304 = vmatpush1.bf16.msra.mxu0 %v279
        %305 = vmatprep.subr.bf16.mxu0 0
        %306 = vmatpush1.bf16.msra.mxu0 %v278
        %307 = vmatprep.subr.bf16.mxu0 0
        %308 = vmatpush2.bf16.msra.mxu0 0
        %309 = vmatprep.subr.bf16.mxu0 0
        %310 = vmatpush2.bf16.msra.mxu0 0
        %311 = vmatprep.subr.bf16.mxu0 0
        %312 = vmatpush2.bf16.msra.mxu0 0
        %313 = vmatprep.subr.bf16.mxu0 0
        %314 = vmatpush2.bf16.msra.mxu0 0
        %315 = vmatprep.subr.bf16.mxu0 0
        %316 = vmatpush2.bf16.msra.mxu0 0
        %317 = vmatprep.subr.bf16.mxu0 0
        %318 = vmatpush2.bf16.msra.mxu0 0
        %319 = vmatprep.subr.bf16.mxu0 0
        %320 = vmatpush2.bf16.msra.mxu0 0
        %321 = vmatprep.subr.bf16.mxu0 0
        %322 = vmatpush2.bf16.msra.mxu0 0
        %323 = vmatprep.mubr.bf16.mxu0 0
        %324 = vmatmul.mubr.bf16.gmra.mxu0 %v285
        %v325 = vpop.f32.mrf.mxu0
        %v326 = vadd.f32 %v267, %v325
        %v327 = vpop.f32.mrf.mxu0
        %v328 = vpop.f32.mrf.mxu0
        %v329 = vpop.f32.mrf.mxu0
        %330 = vdwg.mxu0
        %v331 = vmax.f32 %v326, 0.0
        %vm332 = vcmask 523264
        %333 = vst.msk [vmem:[%s259] sm:$0xff] %vm332, %v331
        %v334 = vpack.c.bf16 %v331, %v331
        %v335 = vld [vmem:[%s4] sm:$0x1]
        %v336 = vld [vmem:[%s3] sm:$0xf]
        %v337 = vld [vmem:[%s3 + $0x4] sm:$0xf]
        %v338 = vld [vmem:[%s3 + $0x8] sm:$0xf]
        %v339 = vld [vmem:[%s3 + $0xc] sm:$0xf]
        %v340 = vld [vmem:[%s3 + $0x10] sm:$0xf]
        %v341 = vld [vmem:[%s3 + $0x14] sm:$0xf]
        %v342 = vld [vmem:[%s3 + $0x18] sm:$0xf]
        %v343 = vld [vmem:[%s3 + $0x1c] sm:$0xf]
        %v352 = vunpack.c.l.b16 %v336
        %v353 = vunpack.c.l.b16 %v337
        %v354 = vunpack.c.l.b16 %v338
        %v355 = vunpack.c.l.b16 %v339
        %v356 = vunpack.c.l.b16 %v340
        %v357 = vunpack.c.l.b16 %v341
        %v358 = vunpack.c.l.b16 %v342
        %v359 = vunpack.c.l.b16 %v343
        %v360 = vpack.c.b16 %v353, %v352
        %v361 = vpack.c.b16 %v355, %v354
        %v362 = vpack.c.b16 %v357, %v356
        %v363 = vpack.c.b16 %v359, %v358
        %v369 = vsel %vm332, %v334, 0
        %371 = vmatprep.subr.bf16.mxu0 0
        %372 = vmatpush1.bf16.msra.mxu0 0
        %373 = vmatprep.subr.bf16.mxu0 0
        %374 = vmatpush1.bf16.msra.mxu0 0
        %375 = vmatprep.subr.bf16.mxu0 0
        %376 = vmatpush1.bf16.msra.mxu0 0
        %377 = vmatprep.subr.bf16.mxu0 0
        %378 = vmatpush1.bf16.msra.mxu0 0
        %379 = vmatprep.subr.bf16.mxu0 0
        %380 = vmatpush1.bf16.msra.mxu0 %v363
        %381 = vmatprep.subr.bf16.mxu0 0
        %382 = vmatpush1.bf16.msra.mxu0 %v362
        %383 = vmatprep.subr.bf16.mxu0 0
        %384 = vmatpush1.bf16.msra.mxu0 %v361
        %385 = vmatprep.subr.bf16.mxu0 0
        %386 = vmatpush1.bf16.msra.mxu0 %v360
        %387 = vmatprep.subr.bf16.mxu0 0
        %388 = vmatpush2.bf16.msra.mxu0 0
        %389 = vmatprep.subr.bf16.mxu0 0
        %390 = vmatpush2.bf16.msra.mxu0 0
        %391 = vmatprep.subr.bf16.mxu0 0
        %392 = vmatpush2.bf16.msra.mxu0 0
        %393 = vmatprep.subr.bf16.mxu0 0
        %394 = vmatpush2.bf16.msra.mxu0 0
        %395 = vmatprep.subr.bf16.mxu0 0
        %396 = vmatpush2.bf16.msra.mxu0 0
        %397 = vmatprep.subr.bf16.mxu0 0
        %398 = vmatpush2.bf16.msra.mxu0 0
        %399 = vmatprep.subr.bf16.mxu0 0
        %400 = vmatpush2.bf16.msra.mxu0 0
        %401 = vmatprep.subr.bf16.mxu0 0
        %402 = vmatpush2.bf16.msra.mxu0 0
        %403 = vmatprep.mubr.bf16.mxu0 0
        %404 = vmatmul.mubr.bf16.gmra.mxu0 %v369
        %v405 = vpop.f32.mrf.mxu0
        %v406 = vadd.f32 0.0, %v405
        %v407 = vpop.f32.mrf.mxu0
        %v408 = vpop.f32.mrf.mxu0
        %v409 = vpop.f32.mrf.mxu0
        %410 = vdwg.mxu0
        %v411 = vadd.f32 %v335, %v406
        %s412 = scalar_lea.vmem %s3, 32
        %v413 = vld [vmem:[%s412] sm:$0xf]
        %v414 = vld [vmem:[%s412 + $0x4] sm:$0xf]
        %v415 = vld [vmem:[%s412 + $0x8] sm:$0xf]
        %v416 = vld [vmem:[%s412 + $0xc] sm:$0xf]
        %v417 = vld [vmem:[%s412 + $0x10] sm:$0xf]
        %v418 = vld [vmem:[%s412 + $0x14] sm:$0xf]
        %v419 = vld [vmem:[%s412 + $0x18] sm:$0xf]
        %v420 = vld [vmem:[%s412 + $0x1c] sm:$0xf]
        %v421 = vshrl.u32 %v334, 16
        %v431 = vunpack.c.l.b16 %v413
        %v432 = vunpack.c.l.b16 %v414
        %v433 = vunpack.c.l.b16 %v415
        %v434 = vunpack.c.l.b16 %v416
        %v435 = vunpack.c.l.b16 %v417
        %v436 = vunpack.c.l.b16 %v418
        %v437 = vunpack.c.l.b16 %v419
        %v438 = vunpack.c.l.b16 %v420
        %v439 = vpack.c.b16 %v432, %v431
        %v440 = vpack.c.b16 %v434, %v433
        %v441 = vpack.c.b16 %v436, %v435
        %v442 = vpack.c.b16 %v438, %v437
        %v448 = vsel %vm332, %v421, 0
        %450 = vmatprep.subr.bf16.mxu0 0
        %451 = vmatpush1.bf16.msra.mxu0 0
        %452 = vmatprep.subr.bf16.mxu0 0
        %453 = vmatpush1.bf16.msra.mxu0 0
        %454 = vmatprep.subr.bf16.mxu0 0
        %455 = vmatpush1.bf16.msra.mxu0 0
        %456 = vmatprep.subr.bf16.mxu0 0
        %457 = vmatpush1.bf16.msra.mxu0 0
        %458 = vmatprep.subr.bf16.mxu0 0
        %459 = vmatpush1.bf16.msra.mxu0 %v442
        %460 = vmatprep.subr.bf16.mxu0 0
        %461 = vmatpush1.bf16.msra.mxu0 %v441
        %462 = vmatprep.subr.bf16.mxu0 0
        %463 = vmatpush1.bf16.msra.mxu0 %v440
        %464 = vmatprep.subr.bf16.mxu0 0
        %465 = vmatpush1.bf16.msra.mxu0 %v439
        %466 = vmatprep.subr.bf16.mxu0 0
        %467 = vmatpush2.bf16.msra.mxu0 0
        %468 = vmatprep.subr.bf16.mxu0 0
        %469 = vmatpush2.bf16.msra.mxu0 0
        %470 = vmatprep.subr.bf16.mxu0 0
        %471 = vmatpush2.bf16.msra.mxu0 0
        %472 = vmatprep.subr.bf16.mxu0 0
        %473 = vmatpush2.bf16.msra.mxu0 0
        %474 = vmatprep.subr.bf16.mxu0 0
        %475 = vmatpush2.bf16.msra.mxu0 0
        %476 = vmatprep.subr.bf16.mxu0 0
        %477 = vmatpush2.bf16.msra.mxu0 0
        %478 = vmatprep.subr.bf16.mxu0 0
        %479 = vmatpush2.bf16.msra.mxu0 0
        %480 = vmatprep.subr.bf16.mxu0 0
        %481 = vmatpush2.bf16.msra.mxu0 0
        %482 = vmatprep.mubr.bf16.mxu0 0
        %483 = vmatmul.mubr.bf16.gmra.mxu0 %v448
        %v484 = vpop.f32.mrf.mxu0
        %v485 = vadd.f32 0.0, %v484
        %v486 = vpop.f32.mrf.mxu0
        %v487 = vpop.f32.mrf.mxu0
        %v488 = vpop.f32.mrf.mxu0
        %489 = vdwg.mxu0
        %v490 = vadd.f32 %v411, %v485
        %s491 = scalar_lea.vmem %s3, 64
        %v492 = vld [vmem:[%s491] sm:$0xf]
        %v493 = vld [vmem:[%s491 + $0x4] sm:$0xf]
        %v494 = vld [vmem:[%s491 + $0x8] sm:$0xf]
        %v495 = vld [vmem:[%s491 + $0xc] sm:$0xf]
        %v496 = vld [vmem:[%s491 + $0x10] sm:$0xf]
        %v497 = vld [vmem:[%s491 + $0x14] sm:$0xf]
        %v498 = vld [vmem:[%s491 + $0x18] sm:$0xf]
        %v499 = vld [vmem:[%s491 + $0x1c] sm:$0xf]
        %v501 = vrot.slane %v334, 1
        %v510 = vunpack.c.l.b16 %v492
        %v511 = vunpack.c.l.b16 %v493
        %v512 = vunpack.c.l.b16 %v494
        %v513 = vunpack.c.l.b16 %v495
        %v514 = vunpack.c.l.b16 %v496
        %v515 = vunpack.c.l.b16 %v497
        %v516 = vunpack.c.l.b16 %v498
        %v517 = vunpack.c.l.b16 %v499
        %v518 = vpack.c.b16 %v511, %v510
        %v519 = vpack.c.b16 %v513, %v512
        %v520 = vpack.c.b16 %v515, %v514
        %v521 = vpack.c.b16 %v517, %v516
        %v527 = vsel %vm332, %v501, 0
        %529 = vmatprep.subr.bf16.mxu0 0
        %530 = vmatpush1.bf16.msra.mxu0 0
        %531 = vmatprep.subr.bf16.mxu0 0
        %532 = vmatpush1.bf16.msra.mxu0 0
        %533 = vmatprep.subr.bf16.mxu0 0
        %534 = vmatpush1.bf16.msra.mxu0 0
        %535 = vmatprep.subr.bf16.mxu0 0
        %536 = vmatpush1.bf16.msra.mxu0 0
        %537 = vmatprep.subr.bf16.mxu0 0
        %538 = vmatpush1.bf16.msra.mxu0 %v521
        %539 = vmatprep.subr.bf16.mxu0 0
        %540 = vmatpush1.bf16.msra.mxu0 %v520
        %541 = vmatprep.subr.bf16.mxu0 0
        %542 = vmatpush1.bf16.msra.mxu0 %v519
        %543 = vmatprep.subr.bf16.mxu0 0
        %544 = vmatpush1.bf16.msra.mxu0 %v518
        %545 = vmatprep.subr.bf16.mxu0 0
        %546 = vmatpush2.bf16.msra.mxu0 0
        %547 = vmatprep.subr.bf16.mxu0 0
        %548 = vmatpush2.bf16.msra.mxu0 0
        %549 = vmatprep.subr.bf16.mxu0 0
        %550 = vmatpush2.bf16.msra.mxu0 0
        %551 = vmatprep.subr.bf16.mxu0 0
        %552 = vmatpush2.bf16.msra.mxu0 0
        %553 = vmatprep.subr.bf16.mxu0 0
        %554 = vmatpush2.bf16.msra.mxu0 0
        %555 = vmatprep.subr.bf16.mxu0 0
        %556 = vmatpush2.bf16.msra.mxu0 0
        %557 = vmatprep.subr.bf16.mxu0 0
        %558 = vmatpush2.bf16.msra.mxu0 0
        %559 = vmatprep.subr.bf16.mxu0 0
        %560 = vmatpush2.bf16.msra.mxu0 0
        %561 = vmatprep.mubr.bf16.mxu0 0
        %562 = vmatmul.mubr.bf16.gmra.mxu0 %v527
        %v563 = vpop.f32.mrf.mxu0
        %v564 = vadd.f32 0.0, %v563
        %v565 = vpop.f32.mrf.mxu0
        %v566 = vpop.f32.mrf.mxu0
        %v567 = vpop.f32.mrf.mxu0
        %568 = vdwg.mxu0
        %v569 = vadd.f32 %v490, %v564
        %s570 = scalar_lea.vmem %s3, 96
        %v571 = vld [vmem:[%s570] sm:$0xf]
        %v572 = vld [vmem:[%s570 + $0x4] sm:$0xf]
        %v573 = vld [vmem:[%s570 + $0x8] sm:$0xf]
        %v574 = vld [vmem:[%s570 + $0xc] sm:$0xf]
        %v575 = vld [vmem:[%s570 + $0x10] sm:$0xf]
        %v576 = vld [vmem:[%s570 + $0x14] sm:$0xf]
        %v577 = vld [vmem:[%s570 + $0x18] sm:$0xf]
        %v578 = vld [vmem:[%s570 + $0x1c] sm:$0xf]
        %v579 = vrot.slane %v421, 1
        %v588 = vunpack.c.l.b16 %v571
        %v589 = vunpack.c.l.b16 %v572
        %v590 = vunpack.c.l.b16 %v573
        %v591 = vunpack.c.l.b16 %v574
        %v592 = vunpack.c.l.b16 %v575
        %v593 = vunpack.c.l.b16 %v576
        %v594 = vunpack.c.l.b16 %v577
        %v595 = vunpack.c.l.b16 %v578
        %v596 = vpack.c.b16 %v589, %v588
        %v597 = vpack.c.b16 %v591, %v590
        %v598 = vpack.c.b16 %v593, %v592
        %v599 = vpack.c.b16 %v595, %v594
        %v605 = vsel %vm332, %v579, 0
        %607 = vmatprep.subr.bf16.mxu0 0
        %608 = vmatpush1.bf16.msra.mxu0 0
        %609 = vmatprep.subr.bf16.mxu0 0
        %610 = vmatpush1.bf16.msra.mxu0 0
        %611 = vmatprep.subr.bf16.mxu0 0
        %612 = vmatpush1.bf16.msra.mxu0 0
        %613 = vmatprep.subr.bf16.mxu0 0
        %614 = vmatpush1.bf16.msra.mxu0 0
        %615 = vmatprep.subr.bf16.mxu0 0
        %616 = vmatpush1.bf16.msra.mxu0 %v599
        %617 = vmatprep.subr.bf16.mxu0 0
        %618 = vmatpush1.bf16.msra.mxu0 %v598
        %619 = vmatprep.subr.bf16.mxu0 0
        %620 = vmatpush1.bf16.msra.mxu0 %v597
        %621 = vmatprep.subr.bf16.mxu0 0
        %622 = vmatpush1.bf16.msra.mxu0 %v596
        %623 = vmatprep.subr.bf16.mxu0 0
        %624 = vmatpush2.bf16.msra.mxu0 0
        %625 = vmatprep.subr.bf16.mxu0 0
        %626 = vmatpush2.bf16.msra.mxu0 0
        %627 = vmatprep.subr.bf16.mxu0 0
        %628 = vmatpush2.bf16.msra.mxu0 0
        %629 = vmatprep.subr.bf16.mxu0 0
        %630 = vmatpush2.bf16.msra.mxu0 0
        %631 = vmatprep.subr.bf16.mxu0 0
        %632 = vmatpush2.bf16.msra.mxu0 0
        %633 = vmatprep.subr.bf16.mxu0 0
        %634 = vmatpush2.bf16.msra.mxu0 0
        %635 = vmatprep.subr.bf16.mxu0 0
        %636 = vmatpush2.bf16.msra.mxu0 0
        %637 = vmatprep.subr.bf16.mxu0 0
        %638 = vmatpush2.bf16.msra.mxu0 0
        %639 = vmatprep.mubr.bf16.mxu0 0
        %640 = vmatmul.mubr.bf16.gmra.mxu0 %v605
        %v641 = vpop.f32.mrf.mxu0
        %v642 = vadd.f32 0.0, %v641
        %v643 = vpop.f32.mrf.mxu0
        %v644 = vpop.f32.mrf.mxu0
        %v645 = vpop.f32.mrf.mxu0
        %646 = vdwg.mxu0
        %v647 = vadd.f32 %v569, %v642
        %s648 = scalar_lea.vmem %s3, 128
        %v649 = vld [vmem:[%s648] sm:$0xf]
        %v650 = vld [vmem:[%s648 + $0x4] sm:$0xf]
        %v651 = vld [vmem:[%s648 + $0x8] sm:$0xf]
        %v652 = vld [vmem:[%s648 + $0xc] sm:$0xf]
        %v653 = vld [vmem:[%s648 + $0x10] sm:$0xf]
        %v654 = vld [vmem:[%s648 + $0x14] sm:$0xf]
        %v655 = vld [vmem:[%s648 + $0x18] sm:$0xf]
        %v656 = vld [vmem:[%s648 + $0x1c] sm:$0xf]
        %v657 = vrot.slane %v334, 2
        %v666 = vunpack.c.l.b16 %v649
        %v667 = vunpack.c.l.b16 %v650
        %v668 = vunpack.c.l.b16 %v651
        %v669 = vunpack.c.l.b16 %v652
        %v670 = vunpack.c.l.b16 %v653
        %v671 = vunpack.c.l.b16 %v654
        %v672 = vunpack.c.l.b16 %v655
        %v673 = vunpack.c.l.b16 %v656
        %v674 = vpack.c.b16 %v667, %v666
        %v675 = vpack.c.b16 %v669, %v668
        %v676 = vpack.c.b16 %v671, %v670
        %v677 = vpack.c.b16 %v673, %v672
        %v683 = vsel %vm332, %v657, 0
        %685 = vmatprep.subr.bf16.mxu0 0
        %686 = vmatpush1.bf16.msra.mxu0 0
        %687 = vmatprep.subr.bf16.mxu0 0
        %688 = vmatpush1.bf16.msra.mxu0 0
        %689 = vmatprep.subr.bf16.mxu0 0
        %690 = vmatpush1.bf16.msra.mxu0 0
        %691 = vmatprep.subr.bf16.mxu0 0
        %692 = vmatpush1.bf16.msra.mxu0 0
        %693 = vmatprep.subr.bf16.mxu0 0
        %694 = vmatpush1.bf16.msra.mxu0 %v677
        %695 = vmatprep.subr.bf16.mxu0 0
        %696 = vmatpush1.bf16.msra.mxu0 %v676
        %697 = vmatprep.subr.bf16.mxu0 0
        %698 = vmatpush1.bf16.msra.mxu0 %v675
        %699 = vmatprep.subr.bf16.mxu0 0
        %700 = vmatpush1.bf16.msra.mxu0 %v674
        %701 = vmatprep.subr.bf16.mxu0 0
        %702 = vmatpush2.bf16.msra.mxu0 0
        %703 = vmatprep.subr.bf16.mxu0 0
        %704 = vmatpush2.bf16.msra.mxu0 0
        %705 = vmatprep.subr.bf16.mxu0 0
        %706 = vmatpush2.bf16.msra.mxu0 0
        %707 = vmatprep.subr.bf16.mxu0 0
        %708 = vmatpush2.bf16.msra.mxu0 0
        %709 = vmatprep.subr.bf16.mxu0 0
        %710 = vmatpush2.bf16.msra.mxu0 0
        %711 = vmatprep.subr.bf16.mxu0 0
        %712 = vmatpush2.bf16.msra.mxu0 0
        %713 = vmatprep.subr.bf16.mxu0 0
        %714 = vmatpush2.bf16.msra.mxu0 0
        %715 = vmatprep.subr.bf16.mxu0 0
        %716 = vmatpush2.bf16.msra.mxu0 0
        %717 = vmatprep.mubr.bf16.mxu0 0
        %718 = vmatmul.mubr.bf16.gmra.mxu0 %v683
        %v719 = vpop.f32.mrf.mxu0
        %v720 = vadd.f32 0.0, %v719
        %v721 = vpop.f32.mrf.mxu0
        %v722 = vpop.f32.mrf.mxu0
        %v723 = vpop.f32.mrf.mxu0
        %724 = vdwg.mxu0
        %v725 = vadd.f32 %v647, %v720
        %s726 = scalar_lea.vmem %s3, 160
        %v727 = vld [vmem:[%s726] sm:$0xf]
        %v728 = vld [vmem:[%s726 + $0x4] sm:$0xf]
        %v729 = vld [vmem:[%s726 + $0x8] sm:$0xf]
        %v730 = vld [vmem:[%s726 + $0xc] sm:$0xf]
        %v731 = vld [vmem:[%s726 + $0x10] sm:$0xf]
        %v732 = vld [vmem:[%s726 + $0x14] sm:$0xf]
        %v733 = vld [vmem:[%s726 + $0x18] sm:$0xf]
        %v734 = vld [vmem:[%s726 + $0x1c] sm:$0xf]
        %v735 = vrot.slane %v421, 2
        %v744 = vunpack.c.l.b16 %v727
        %v745 = vunpack.c.l.b16 %v728
        %v746 = vunpack.c.l.b16 %v729
        %v747 = vunpack.c.l.b16 %v730
        %v748 = vunpack.c.l.b16 %v731
        %v749 = vunpack.c.l.b16 %v732
        %v750 = vunpack.c.l.b16 %v733
        %v751 = vunpack.c.l.b16 %v734
        %v752 = vpack.c.b16 %v745, %v744
        %v753 = vpack.c.b16 %v747, %v746
        %v754 = vpack.c.b16 %v749, %v748
        %v755 = vpack.c.b16 %v751, %v750
        %v761 = vsel %vm332, %v735, 0
        %763 = vmatprep.subr.bf16.mxu0 0
        %764 = vmatpush1.bf16.msra.mxu0 0
        %765 = vmatprep.subr.bf16.mxu0 0
        %766 = vmatpush1.bf16.msra.mxu0 0
        %767 = vmatprep.subr.bf16.mxu0 0
        %768 = vmatpush1.bf16.msra.mxu0 0
        %769 = vmatprep.subr.bf16.mxu0 0
        %770 = vmatpush1.bf16.msra.mxu0 0
        %771 = vmatprep.subr.bf16.mxu0 0
        %772 = vmatpush1.bf16.msra.mxu0 %v755
        %773 = vmatprep.subr.bf16.mxu0 0
        %774 = vmatpush1.bf16.msra.mxu0 %v754
        %775 = vmatprep.subr.bf16.mxu0 0
        %776 = vmatpush1.bf16.msra.mxu0 %v753
        %777 = vmatprep.subr.bf16.mxu0 0
        %778 = vmatpush1.bf16.msra.mxu0 %v752
        %779 = vmatprep.subr.bf16.mxu0 0
        %780 = vmatpush2.bf16.msra.mxu0 0
        %781 = vmatprep.subr.bf16.mxu0 0
        %782 = vmatpush2.bf16.msra.mxu0 0
        %783 = vmatprep.subr.bf16.mxu0 0
        %784 = vmatpush2.bf16.msra.mxu0 0
        %785 = vmatprep.subr.bf16.mxu0 0
        %786 = vmatpush2.bf16.msra.mxu0 0
        %787 = vmatprep.subr.bf16.mxu0 0
        %788 = vmatpush2.bf16.msra.mxu0 0
        %789 = vmatprep.subr.bf16.mxu0 0
        %790 = vmatpush2.bf16.msra.mxu0 0
        %791 = vmatprep.subr.bf16.mxu0 0
        %792 = vmatpush2.bf16.msra.mxu0 0
        %793 = vmatprep.subr.bf16.mxu0 0
        %794 = vmatpush2.bf16.msra.mxu0 0
        %795 = vmatprep.mubr.bf16.mxu0 0
        %796 = vmatmul.mubr.bf16.gmra.mxu0 %v761
        %v797 = vpop.f32.mrf.mxu0
        %v798 = vadd.f32 0.0, %v797
        %v799 = vpop.f32.mrf.mxu0
        %v800 = vpop.f32.mrf.mxu0
        %v801 = vpop.f32.mrf.mxu0
        %802 = vdwg.mxu0
        %v803 = vadd.f32 %v725, %v798
        %s804 = scalar_lea.vmem %s3, 192
        %v805 = vld [vmem:[%s804] sm:$0xf]
        %v806 = vld [vmem:[%s804 + $0x4] sm:$0xf]
        %v807 = vld [vmem:[%s804 + $0x8] sm:$0xf]
        %v808 = vld [vmem:[%s804 + $0xc] sm:$0xf]
        %v809 = vld [vmem:[%s804 + $0x10] sm:$0xf]
        %v810 = vld [vmem:[%s804 + $0x14] sm:$0xf]
        %v811 = vld [vmem:[%s804 + $0x18] sm:$0xf]
        %v812 = vld [vmem:[%s804 + $0x1c] sm:$0xf]
        %v813 = vrot.slane %v334, 3
        %v822 = vunpack.c.l.b16 %v805
        %v823 = vunpack.c.l.b16 %v806
        %v824 = vunpack.c.l.b16 %v807
        %v825 = vunpack.c.l.b16 %v808
        %v826 = vunpack.c.l.b16 %v809
        %v827 = vunpack.c.l.b16 %v810
        %v828 = vunpack.c.l.b16 %v811
        %v829 = vunpack.c.l.b16 %v812
        %v830 = vpack.c.b16 %v823, %v822
        %v831 = vpack.c.b16 %v825, %v824
        %v832 = vpack.c.b16 %v827, %v826
        %v833 = vpack.c.b16 %v829, %v828
        %v839 = vsel %vm332, %v813, 0
        %841 = vmatprep.subr.bf16.mxu0 0
        %842 = vmatpush1.bf16.msra.mxu0 0
        %843 = vmatprep.subr.bf16.mxu0 0
        %844 = vmatpush1.bf16.msra.mxu0 0
        %845 = vmatprep.subr.bf16.mxu0 0
        %846 = vmatpush1.bf16.msra.mxu0 0
        %847 = vmatprep.subr.bf16.mxu0 0
        %848 = vmatpush1.bf16.msra.mxu0 0
        %849 = vmatprep.subr.bf16.mxu0 0
        %850 = vmatpush1.bf16.msra.mxu0 %v833
        %851 = vmatprep.subr.bf16.mxu0 0
        %852 = vmatpush1.bf16.msra.mxu0 %v832
        %853 = vmatprep.subr.bf16.mxu0 0
        %854 = vmatpush1.bf16.msra.mxu0 %v831
        %855 = vmatprep.subr.bf16.mxu0 0
        %856 = vmatpush1.bf16.msra.mxu0 %v830
        %857 = vmatprep.subr.bf16.mxu0 0
        %858 = vmatpush2.bf16.msra.mxu0 0
        %859 = vmatprep.subr.bf16.mxu0 0
        %860 = vmatpush2.bf16.msra.mxu0 0
        %861 = vmatprep.subr.bf16.mxu0 0
        %862 = vmatpush2.bf16.msra.mxu0 0
        %863 = vmatprep.subr.bf16.mxu0 0
        %864 = vmatpush2.bf16.msra.mxu0 0
        %865 = vmatprep.subr.bf16.mxu0 0
        %866 = vmatpush2.bf16.msra.mxu0 0
        %867 = vmatprep.subr.bf16.mxu0 0
        %868 = vmatpush2.bf16.msra.mxu0 0
        %869 = vmatprep.subr.bf16.mxu0 0
        %870 = vmatpush2.bf16.msra.mxu0 0
        %871 = vmatprep.subr.bf16.mxu0 0
        %872 = vmatpush2.bf16.msra.mxu0 0
        %873 = vmatprep.mubr.bf16.mxu0 0
        %874 = vmatmul.mubr.bf16.gmra.mxu0 %v839
        %v875 = vpop.f32.mrf.mxu0
        %v876 = vadd.f32 0.0, %v875
        %v877 = vpop.f32.mrf.mxu0
        %v878 = vpop.f32.mrf.mxu0
        %v879 = vpop.f32.mrf.mxu0
        %880 = vdwg.mxu0
        %v881 = vadd.f32 %v803, %v876
        %s882 = scalar_lea.vmem %s3, 224
        %v883 = vld [vmem:[%s882] sm:$0xf]
        %v884 = vld [vmem:[%s882 + $0x4] sm:$0xf]
        %v885 = vld [vmem:[%s882 + $0x8] sm:$0xf]
        %v886 = vld [vmem:[%s882 + $0xc] sm:$0xf]
        %v887 = vld [vmem:[%s882 + $0x10] sm:$0xf]
        %v888 = vld [vmem:[%s882 + $0x14] sm:$0xf]
        %v889 = vld [vmem:[%s882 + $0x18] sm:$0xf]
        %v890 = vld [vmem:[%s882 + $0x1c] sm:$0xf]
        %v891 = vrot.slane %v421, 3
        %v900 = vunpack.c.l.b16 %v883
        %v901 = vunpack.c.l.b16 %v884
        %v902 = vunpack.c.l.b16 %v885
        %v903 = vunpack.c.l.b16 %v886
        %v904 = vunpack.c.l.b16 %v887
        %v905 = vunpack.c.l.b16 %v888
        %v906 = vunpack.c.l.b16 %v889
        %v907 = vunpack.c.l.b16 %v890
        %v908 = vpack.c.b16 %v901, %v900
        %v909 = vpack.c.b16 %v903, %v902
        %v910 = vpack.c.b16 %v905, %v904
        %v911 = vpack.c.b16 %v907, %v906
        %v917 = vsel %vm332, %v891, 0
        %919 = vmatprep.subr.bf16.mxu0 0
        %920 = vmatpush1.bf16.msra.mxu0 0
        %921 = vmatprep.subr.bf16.mxu0 0
        %922 = vmatpush1.bf16.msra.mxu0 0
        %923 = vmatprep.subr.bf16.mxu0 0
        %924 = vmatpush1.bf16.msra.mxu0 0
        %925 = vmatprep.subr.bf16.mxu0 0
        %926 = vmatpush1.bf16.msra.mxu0 0
        %927 = vmatprep.subr.bf16.mxu0 0
        %928 = vmatpush1.bf16.msra.mxu0 %v911
        %929 = vmatprep.subr.bf16.mxu0 0
        %930 = vmatpush1.bf16.msra.mxu0 %v910
        %931 = vmatprep.subr.bf16.mxu0 0
        %932 = vmatpush1.bf16.msra.mxu0 %v909
        %933 = vmatprep.subr.bf16.mxu0 0
        %934 = vmatpush1.bf16.msra.mxu0 %v908
        %935 = vmatprep.subr.bf16.mxu0 0
        %936 = vmatpush2.bf16.msra.mxu0 0
        %937 = vmatprep.subr.bf16.mxu0 0
        %938 = vmatpush2.bf16.msra.mxu0 0
        %939 = vmatprep.subr.bf16.mxu0 0
        %940 = vmatpush2.bf16.msra.mxu0 0
        %941 = vmatprep.subr.bf16.mxu0 0
        %942 = vmatpush2.bf16.msra.mxu0 0
        %943 = vmatprep.subr.bf16.mxu0 0
        %944 = vmatpush2.bf16.msra.mxu0 0
        %945 = vmatprep.subr.bf16.mxu0 0
        %946 = vmatpush2.bf16.msra.mxu0 0
        %947 = vmatprep.subr.bf16.mxu0 0
        %948 = vmatpush2.bf16.msra.mxu0 0
        %949 = vmatprep.subr.bf16.mxu0 0
        %950 = vmatpush2.bf16.msra.mxu0 0
        %951 = vmatprep.mubr.bf16.mxu0 0
        %952 = vmatmul.mubr.bf16.gmra.mxu0 %v917
        %v953 = vpop.f32.mrf.mxu0
        %v954 = vadd.f32 0.0, %v953
        %v955 = vpop.f32.mrf.mxu0
        %v956 = vpop.f32.mrf.mxu0
        %v957 = vpop.f32.mrf.mxu0
        %958 = vdwg.mxu0
        %v959 = vadd.f32 %v881, %v954
        %960 = vst [vmem:[%s250] sm:$0x1] %v959
        %p961 = scmp.lt.s32.totalorder %s21, 1
        %s962 = scalar_select %p961, %s21, 1
        %s963 = smul.addr %s962, 8
        %s964 = scalar_lea.vmem %s5, %s963
        %s965 = sand.u32 %s165, 1
        %s966 = scalar_lea.sflag [#allocation3], %s965
        %s967 = sand.u32 %s165, 1
        %s968 = scalar_lea.vmem [#allocation2], %s967
        // Predicated region
        $region41: #{wrapper_forward.1} parent=39 // pred_check
          %p969 = pneg %p149
        $region42: #{wrapper_forward.1} parent=39 // pred_check_branch
          %971 = sbr.rel (%p969) target = $region44
        $region43: #{wrapper_forward.1} parent=39 // pred_region
          _
        $region44: #{wrapper_forward.1} parent=39 // pred_fallthru
          _
        // Predicated region
        $region45: #{wrapper_forward.1} parent=39 // pred_check
          %p972 = pneg %p175
        $region46: #{wrapper_forward.1} parent=39 // pred_check_branch
          %974 = sbr.rel (%p972) target = $region48
        $region47: #{wrapper_forward.1} parent=39 // pred_region
          %s976 = ssub.s32 16, 16
          %977 = vsyncadd %s966, %s976
          %s978 = smul.addr %s21, 16
          %s979 = scalar_lea.hbm %s6, %s978
          %s981 = sshll.u32 %s968, 4
          %s982 = int_to_ptr.vmem [resolvable:$true] %s981
          %984 = dma.vmem_to_hbm [thread:$0]  %s982, 16, %s979, %s966
        $region48: #{wrapper_forward.1} parent=39 // pred_fallthru
          _
      $region40: #{wrapper_forward.1} parent=5 // pred_fallthru
        _
      %p985 = scmp.le.s32.totalorder 2, %s16
      // Predicated region
      $region49: #{wrapper_forward.1} parent=5 // pred_check
        %p986 = pneg %p985
      $region50: #{wrapper_forward.1} parent=5 // pred_check_branch
        %988 = sbr.rel (%p986) target = $region52
      $region51: #{wrapper_forward.1} parent=5 // pred_region
        %s989 = ssub.s32 %s16, 2
        // Predicated region
        $region53: #{wrapper_forward.1} parent=51 // pred_check
          %p990 = pneg %p155
        $region54: #{wrapper_forward.1} parent=51 // pred_check_branch
          %992 = sbr.rel (%p990) target = $region56
        $region55: #{wrapper_forward.1} parent=51 // pred_region
          %p993 = scmp.lt.s32.totalorder %s22, 1
          %s994 = scalar_select %p993, %s22, 1
          %s995 = smul.addr %s994, 8
          %s996 = scalar_lea.vmem %s5, %s995
        $region56: #{wrapper_forward.1} parent=51 // pred_fallthru
          _
        // Predicated region
        $region57: #{wrapper_forward.1} parent=51 // pred_check
          %p997 = pneg %p181
        $region58: #{wrapper_forward.1} parent=51 // pred_check_branch
          %999 = sbr.rel (%p997) target = $region60
        $region59: #{wrapper_forward.1} parent=51 // pred_region
          %s1000 = sand.u32 %s166, 1
          %s1001 = scalar_lea.sflag [#allocation3], %s1000
          %s1002 = sand.u32 %s166, 1
          %s1003 = scalar_lea.vmem [#allocation2], %s1002
          %1004 = dma.done %s1001, 16
        $region60: #{wrapper_forward.1} parent=51 // pred_fallthru
          _
      $region52: #{wrapper_forward.1} parent=5 // pred_fallthru
        _
    $region6: #{wrapper_forward.1} parent=1 // loop_footer
      %s20 = sadd.s32 1, %s16
    $region7: #{wrapper_forward.1} parent=1 // loop_footer_branch
      %15 = sbr.rel target = $region3
    $region8: #{wrapper_forward.1} parent=1 // loop_exit
      _
    %1005 = vsyncpa [#allocation3], 1
    %s1006 = scalar_lea.sflag [#allocation3], 1
    %1007 = vsyncpa %s1006, 1

</llo_original>
